<compile_context>
chip_gen: v7x
topology: tpu7x:2x2x1
jax: 0.10.0
libtpu: 0.0.40
codegen_flags: <defaults>
</compile_context>

<pallas_src>
import jax
import jax.numpy as jnp
from jax import lax
from jax.experimental import pallas as pl
from jax.experimental.pallas import tpu as pltpu


def _device_kind():
    try:
        return jax.devices()[0].device_kind.lower()
    except Exception:
        return ""


def _make_kernel(beta, tile_m, m_rows, hdim, blocks_per_core, n_split,
                 need_mask, bf16_math):
    beta = float(beta)

    def _loss(p_ref, t_ref):
        p = p_ref[...]
        t = t_ref[...]
        if bf16_math:
            # bf16 VALU packs 2 elems/lane on v6e/v7x; minor numeric change
            # vs the f32-cast-first path (fine for a loss).
            ad = jnp.abs(p - t).astype(jnp.float32)
        else:
            ad = jnp.abs(p.astype(jnp.float32) - t.astype(jnp.float32))
        if beta == 0.0:
            return ad                        # SmoothL1(beta=0) degenerates to L1
        # Branch-free Huber: mathematically identical to the where() form.
        c = jnp.minimum(ad, beta)
        return (0.5 / beta) * (c * c) + (ad - c)

    def _fold(loss):
        # Fold tile rows down to the 8 resident sublanes (cheap XLU fold;
        # the final fold of the 8 rows happens in the wrapper).
        return loss.reshape(tile_m // 8, 8, hdim).sum(axis=0)

    def kernel(p_ref, t_ref, o_ref):
        if n_split > 1:
            c = pl.program_id(0)             # core-split (v7x) axis
            i = pl.program_id(1)             # reduction axis
            blk = c * blocks_per_core + i
        else:
            i = pl.program_id(0)
            blk = i

        @pl.when(i == 0)
        def _init():
            o_ref[...] = jnp.zeros_like(o_ref)

        loss = _loss(p_ref, t_ref)

        if tile_m % 8 != 0:
            # Only reachable when a single block covers all rows exactly.
            o_ref[0:1, :] += jnp.sum(loss, axis=0, keepdims=True)
            return

        if not need_mask:
            o_ref[...] += _fold(loss)
        else:
            # Mask work only on the tail block (and the fully-masked clamped
            # duplicate block on the second core split); interior blocks take
            # the unmasked fast path.
            is_tail = blk * tile_m + tile_m > m_rows

            @pl.when(jnp.logical_not(is_tail))
            def _fast():
                o_ref[...] += _fold(loss)

            @pl.when(is_tail)
            def _masked():
                # Rows past the true row count carry garbage; drop them with a
                # select (NOT a multiply -> NaN/Inf safe).
                row_ids = blk * tile_m + lax.broadcasted_iota(
                    jnp.int32, (tile_m, 1), 0)
                o_ref[...] += _fold(jnp.where(row_ids < m_rows, loss, 0.0))

    return kernel


def smooth_l1_loss(preds, target, beta=1.0, *,
                   block_budget_bytes=None, bf16_fast_math=None):
    """Equivalent of torch.mean(torch.mean(smooth_l1(p,t,'none'),0),0) for (B,S,H)."""
    assert preds.shape == target.shape and preds.ndim == 3
    B, S, H = preds.shape
    M = B * S

    kind = _device_kind()
    is_v7x = ("v7" in kind) or ("tpu7" in kind)
    is_v5e = ("v5e" in kind) or ("v5 lite" in kind) or ("v5lite" in kind)

    # Flatten rows (free reshape); keep native dtype through the DMA.
    p2 = preds.reshape(M, H)
    t2 = target.reshape(M, H)
    itemsize = jnp.dtype(preds.dtype).itemsize

    # bf16 sub/abs only where the VPU has bf16 lanes (v6e / v7x).
    if bf16_fast_math is None:
        bf16_fast_math = (preds.dtype == jnp.bfloat16) and not is_v5e
    bf16_fast_math = bool(bf16_fast_math) and preds.dtype == jnp.bfloat16

    # Chip-dependent tile budget. Counts 2 inputs x 2 pipeline buffers at the
    # native width PLUS ~3 full-tile f32 in-kernel intermediates so enlarging
    # the tile cannot blow VMEM.
    if block_budget_bytes is None:
        if is_v7x:
            block_budget_bytes = 24 * 1024 * 1024
        elif is_v5e:
            block_budget_bytes = 12 * 1024 * 1024
        else:
            block_budget_bytes = 16 * 1024 * 1024
    per_row_bytes = H * (2 * 2 * itemsize + 3 * 4)
    tile_m = max(8, (block_budget_bytes // per_row_bytes) // 8 * 8)
    if tile_m >= M:
        tile_m = M                               # single full-extent block

    num_blocks = pl.cdiv(M, tile_m)

    # 2-way core split only where there are two TensorCores (v7x). On v5e/v6e
    # it would just be a serial loop that costs a duplicate clamped tile DMA
    # and per-element masking for nothing.
    n_split = 2 if (is_v7x and num_blocks >= 2) else 1
    blocks_per_core = pl.cdiv(num_blocks, n_split)
    need_mask = (M % tile_m != 0) or (blocks_per_core * n_split != num_blocks)

    kernel = _make_kernel(beta, tile_m, M, H, blocks_per_core, n_split,
                          need_mask, bf16_fast_math)

    out_shape = jax.ShapeDtypeStruct((n_split * 8, H), jnp.float32)
    cost = pl.CostEstimate(flops=6 * M * H, transcendentals=0,
                           bytes_accessed=2 * M * H * itemsize + n_split * 8 * H * 4)
    vmem_limit = (48 if is_v7x else 64) * 1024 * 1024

    if n_split > 1:
        def in_map(c, i):
            # Clamp so the duplicated tail step on the second core stays
            # in-bounds (its contribution is fully masked inside the kernel).
            return (jnp.minimum(c * blocks_per_core + i, num_blocks - 1), 0)

        grid = (n_split, blocks_per_core)
        out_map = lambda c, i: (c, 0)
        # CORE_PARALLEL actually shards across TensorCores on v7x; fall back
        # to plain PARALLEL if the current toolchain rejects it.
        sem_options = [(pltpu.CORE_PARALLEL, pltpu.ARBITRARY),
                       (pltpu.PARALLEL, pltpu.ARBITRARY)]
    else:
        in_map = lambda i: (i, 0)
        grid = (num_blocks,)
        out_map = lambda i: (0, 0)
        sem_options = [(pltpu.ARBITRARY,)]

    partials = None
    last_err = None
    for sems in sem_options:
        try:
            partials = pl.pallas_call(
                kernel,
                out_shape=out_shape,
                grid=grid,
                in_specs=[pl.BlockSpec((tile_m, H), in_map),
                          pl.BlockSpec((tile_m, H), in_map)],
                out_specs=pl.BlockSpec((8, H), out_map),
                compiler_params=pltpu.CompilerParams(
                    dimension_semantics=sems,
                    vmem_limit_bytes=vmem_limit),
                cost_estimate=cost,
            )(p2, t2)
            break
        except Exception as e:      # pragma: no cover - CORE_PARALLEL fallback
            last_err = e
            partials = None
    if partials is None:
        raise last_err

    # Sum the per-core / per-sublane partials; single exact 1/(B*S) scale.
    result = partials.sum(axis=0) * (1.0 / float(M))
    return result.astype(preds.dtype)


def _reference(preds, target, beta=1.0):
    d = preds - target
    ad = jnp.abs(d)
    if beta == 0.0:
        loss = ad
    else:
        loss = jnp.where(ad < beta, 0.5 * d * d / beta, ad - 0.5 * beta)
    return jnp.mean(jnp.mean(loss, axis=0), axis=0)


if __name__ == "__main__":
    key = jax.random.PRNGKey(0)
    k1, k2, k3, k4, k5, k6 = jax.random.split(key, 6)

    # Case 1: lane-friendly H, single full-extent block.
    B, S, H = 4, 8, 128
    preds = jax.random.normal(k1, (B, S, H), dtype=jnp.float32)
    target = jax.random.normal(k2, (B, S, H), dtype=jnp.float32)
    out = smooth_l1_loss(preds, target, beta=1.0)
    jax.block_until_ready(out)
    ref = _reference(preds, target, beta=1.0)
    assert out.shape == (H,)
    assert jnp.allclose(out, ref, atol=1e-5, rtol=1e-5)

    # Case 2: tiny block budget forces the tiled reduction path; M not a
    # multiple of the tile exercises the tail-block mask (and, on v7x, the
    # dual-core split with a clamped duplicate block).
    B2, S2, H2 = 9, 29, 128
    p2 = jax.random.normal(k3, (B2, S2, H2), dtype=jnp.float32)
    t2 = jax.random.normal(k4, (B2, S2, H2), dtype=jnp.float32)
    out2 = smooth_l1_loss(p2, t2, beta=0.5, block_budget_bytes=64 * 1024)
    jax.block_until_ready(out2)
    ref2 = _reference(p2, t2, beta=0.5)
    assert jnp.allclose(out2, ref2, atol=1e-5, rtol=1e-5)

    # Case 3: bf16 inputs, non-128 H (no wrapper pad now), M not multiple of 8.
    B3, S3, H3 = 2, 3, 40
    p3 = jax.random.normal(k5, (B3, S3, H3), dtype=jnp.bfloat16)
    t3 = jax.random.normal(k6, (B3, S3, H3), dtype=jnp.bfloat16)
    out3 = smooth_l1_loss(p3, t3, beta=1.0)
    jax.block_until_ready(out3)
    ref3 = _reference(p3.astype(jnp.float32), t3.astype(jnp.float32), beta=1.0)
    assert out3.shape == (H3,)
    assert jnp.allclose(out3.astype(jnp.float32), ref3, atol=2e-2, rtol=2e-2)

    print("KERNEL_OK")
</pallas_src>

<mosaic_0001>
module attributes {stable_mosaic.version = 11 : i64} {
  func.func @kernel(%arg0: i32, %arg1: memref<32x128xf32, #tpu.memory_space<vmem>>, %arg2: memref<32x128xf32, #tpu.memory_space<vmem>>, %arg3: memref<8x128xf32, #tpu.memory_space<vmem>>) attributes {dimension_semantics = [#tpu.dimension_semantics<arbitrary>], iteration_bounds = array<i64: 1>, scalar_prefetch = 0 : i64, scratch_operands = 0 : i64, tpu.core_type = #tpu.core_type<tc>, window_params = [{transform_indices = @transform_0, window_bounds = array<i64: 32, 128>}, {transform_indices = @transform_1, window_bounds = array<i64: 32, 128>}, {pipeline_mode = #tpu.pipeline_mode<synchronous>, transform_indices = @transform_2, window_bounds = array<i64: 8, 128>}]} {
    %c0_i32 = arith.constant 0 : i32
    %0 = arith.cmpi eq, %arg0, %c0_i32 : i32
    %1 = arith.extui %0 : i1 to i32
    %c0_i32_0 = arith.constant 0 : i32
    %2 = arith.cmpi ne, %1, %c0_i32_0 : i32
    scf.if %2 {
      %cst_10 = arith.constant 0.000000e+00 : f32
      %19 = vector.broadcast %cst_10 : f32 to vector<8x128xf32>
      %c0_11 = arith.constant 0 : index
      %c0_12 = arith.constant 0 : index
      %20 = vector.load %arg3[%c0_11, %c0_12] : memref<8x128xf32, #tpu.memory_space<vmem>>, vector<8x128xf32>
      tpu.vector_store %arg3[%c0_11, %c0_12], %19 {strides = array<i32>} : memref<8x128xf32, #tpu.memory_space<vmem>>, vector<8x128xf32>,
    } else {
    }
    %c0 = arith.constant 0 : index
    %c0_1 = arith.constant 0 : index
    %3 = vector.load %arg1[%c0, %c0_1] : memref<32x128xf32, #tpu.memory_space<vmem>>, vector<32x128xf32>
    %c0_2 = arith.constant 0 : index
    %c0_3 = arith.constant 0 : index
    %4 = vector.load %arg2[%c0_2, %c0_3] : memref<32x128xf32, #tpu.memory_space<vmem>>, vector<32x128xf32>
    %5 = arith.subf %3, %4 : vector<32x128xf32>
    %6 = math.absf %5 : vector<32x128xf32>
    %cst = arith.constant 1.000000e+00 : f32
    %7 = vector.broadcast %cst : f32 to vector<32x128xf32>
    %8 = arith.minimumf %6, %7 : vector<32x128xf32>
    %9 = arith.mulf %8, %8 : vector<32x128xf32>
    %cst_4 = arith.constant 5.000000e-01 : f32
    %10 = vector.broadcast %cst_4 : f32 to vector<32x128xf32>
    %11 = arith.mulf %10, %9 : vector<32x128xf32>
    %12 = arith.subf %6, %8 : vector<32x128xf32>
    %13 = arith.addf %11, %12 : vector<32x128xf32>
    %c0_5 = arith.constant 0 : index
    %c0_6 = arith.constant 0 : index
    %14 = vector.load %arg3[%c0_5, %c0_6] : memref<8x128xf32, #tpu.memory_space<vmem>>, vector<8x128xf32>
    %15 = vector.shape_cast %13 : vector<32x128xf32> to vector<4x8x128xf32>
    %cst_7 = arith.constant dense<0.000000e+00> : vector<8x128xf32>
    %16 = vector.multi_reduction <add>, %15, %cst_7 [0] : vector<4x8x128xf32> to vector<8x128xf32>
    %17 = arith.addf %14, %16 : vector<8x128xf32>
    %c0_8 = arith.constant 0 : index
    %c0_9 = arith.constant 0 : index
    %18 = vector.load %arg3[%c0_8, %c0_9] : memref<8x128xf32, #tpu.memory_space<vmem>>, vector<8x128xf32>
    tpu.vector_store %arg3[%c0_8, %c0_9], %17 {strides = array<i32>} : memref<8x128xf32, #tpu.memory_space<vmem>>, vector<8x128xf32>,
    return
  }
  func.func @transform_0(%arg0: i32) -> (i32, i32) {
    %c0_i32 = arith.constant 0 : i32
    %c0_i32_0 = arith.constant 0 : i32
    return %arg0, %c0_i32 : i32, i32
  }
  func.func @transform_1(%arg0: i32) -> (i32, i32) {
    %c0_i32 = arith.constant 0 : i32
    %c0_i32_0 = arith.constant 0 : i32
    return %arg0, %c0_i32 : i32, i32
  }
  func.func @transform_2(%arg0: i32) -> (i32, i32) {
    %c0_i32 = arith.constant 0 : i32
    %c0_i32_0 = arith.constant 0 : i32
    %c0_i32_1 = arith.constant 0 : i32
    return %c0_i32, %c0_i32_0 : i32, i32
  }
}

</mosaic_0001>

<llo_original>
// kernel: tpu_custom_call.1
$region0: #{tpu_custom_call.1}
  #allocation0 [shape = 'u32[]', space=smem, size = 0x4, offset = 0x4, fixed_abs, tag = 'smem constant byte address 0x4 - core index']
  #allocation1 [shape = 'u32[144,128]{1,0:T(1,128)}', space=vmem, size = 0x12000, scoped, tag = 'internal scratch']
  %s0 = inlined_call_operand.hbm [shape: f32[32,128], index: 0, kind: input, shape index: {}]
  %s1 = inlined_call_operand.hbm [shape: f32[32,128], index: 1, kind: input, shape index: {}]
  %s2 = inlined_call_operand.hbm [shape: f32[8,128], index: 2, kind: output, shape index: {}]
  %s3 = sld [smem:[#allocation0]]
  $region30: #{tpu_custom_call.1} parent=0
    _
  %s5 = ssub.s32 1, %s3
  %s6 = scalar_select 0, %s5, %s3
  $region1: #{tpu_custom_call.1} parent=0
    #allocation2 [shape = 'u8[16384]{0}', space=vmem, size = 0x4000, scoped, tag = 'input window, operand 0, single buffered']
    #allocation3 [shape = 's32[1]{0}', space=sflag, size = 0x4, scoped, tag = 'scoped memory for tpu_custom_call.1']
    #allocation4 [shape = 's32[1]{0}', space=sflag, size = 0x4, scoped, tag = 'scoped memory for tpu_custom_call.1']
    #allocation5 [shape = 'u8[16384]{0}', space=vmem, size = 0x4000, scoped, tag = 'input window, operand 1, single buffered']
    #allocation6 [shape = 's32[1]{0}', space=sflag, size = 0x4, scoped, tag = 'scoped memory for tpu_custom_call.1']
    #allocation7 [shape = 'u8[4096]{0}', space=vmem, size = 0x1000, scoped, tag = 'output window, operand 0, single buffered']
    %7 = vsyncpa [#allocation3], 0
    %8 = vsyncpa [#allocation6], 0
    %9 = vsyncpa [#allocation4], 0
    // Predicated region
    $region2: #{tpu_custom_call.1} parent=1 // pred_check
      _
    $region3: #{tpu_custom_call.1} parent=1 // pred_check_branch
      %11 = sbr.rel (0) target = $region5
    $region4: #{tpu_custom_call.1} parent=1 // pred_region
      %s13 = ssub.s32 512, 512
      %14 = vsyncadd [#allocation3], %s13
      %s15 = sshll.u32 [#allocation2], 4
      %s16 = int_to_ptr.vmem [resolvable:$true] %s15
      %21 = dma.hbm_to_vmem [thread:$0]  %s0, 512, %s16, [#allocation3], 128, 128, 8
    $region5: #{tpu_custom_call.1} parent=1 // pred_fallthru
      _
    // Predicated region
    $region6: #{tpu_custom_call.1} parent=1 // pred_check
      _
    $region7: #{tpu_custom_call.1} parent=1 // pred_check_branch
      %23 = sbr.rel (0) target = $region9
    $region8: #{tpu_custom_call.1} parent=1 // pred_region
      %s25 = ssub.s32 512, 512
      %26 = vsyncadd [#allocation6], %s25
      %s27 = sshll.u32 [#allocation5], 4
      %s28 = int_to_ptr.vmem [resolvable:$true] %s27
      %33 = dma.hbm_to_vmem [thread:$0]  %s1, 512, %s28, [#allocation6], 128, 128, 8
    $region9: #{tpu_custom_call.1} parent=1 // pred_fallthru
      _
    // Predicated region
    $region10: #{tpu_custom_call.1} parent=1 // pred_check
      _
    $region11: #{tpu_custom_call.1} parent=1 // pred_check_branch
      %35 = sbr.rel (0) target = $region13
    $region12: #{tpu_custom_call.1} parent=1 // pred_region
      %36 = dma.done [#allocation3], 512
    $region13: #{tpu_custom_call.1} parent=1 // pred_fallthru
      _
    // Predicated region
    $region14: #{tpu_custom_call.1} parent=1 // pred_check
      _
    $region15: #{tpu_custom_call.1} parent=1 // pred_check_branch
      %38 = sbr.rel (0) target = $region17
    $region16: #{tpu_custom_call.1} parent=1 // pred_region
      %39 = dma.done [#allocation6], 512
    $region17: #{tpu_custom_call.1} parent=1 // pred_fallthru
      _
    %p40 = scmp.eq.s32.totalorder 0, 0
    // Predicated region
    $region18: #{tpu_custom_call.1} parent=1 // pred_check
      %p41 = pneg %p40
    $region19: #{tpu_custom_call.1} parent=1 // pred_check_branch
      %43 = sbr.rel (%p41) target = $region21
    $region20: #{tpu_custom_call.1} parent=1 // pred_region
      %44 = vst [vmem:[#allocation7] sm:$0xff] 0.0
    $region21: #{tpu_custom_call.1} parent=1 // pred_fallthru
      _
    %v45 = vld [vmem:[#allocation2] sm:$0xff]
    %v46 = vld [vmem:[#allocation2 + $0x8] sm:$0xff]
    %v47 = vld [vmem:[#allocation2 + $0x10] sm:$0xff]
    %v48 = vld [vmem:[#allocation2 + $0x18] sm:$0xff]
    %v49 = vld [vmem:[#allocation5] sm:$0xff]
    %v50 = vld [vmem:[#allocation5 + $0x8] sm:$0xff]
    %v51 = vld [vmem:[#allocation5 + $0x10] sm:$0xff]
    %v52 = vld [vmem:[#allocation5 + $0x18] sm:$0xff]
    %v53 = vsub.f32 %v45, %v49
    %v54 = vsub.f32 %v46, %v50
    %v55 = vsub.f32 %v47, %v51
    %v56 = vsub.f32 %v48, %v52
    %v57 = vand.u32 2147483647, %v53
    %v58 = vand.u32 2147483647, %v54
    %v59 = vand.u32 2147483647, %v55
    %v60 = vand.u32 2147483647, %v56
    %v61 = vmin.f32 %v57, 1.0
    %v62 = vmin.f32 %v58, 1.0
    %v63 = vmin.f32 %v59, 1.0
    %v64 = vmin.f32 %v60, 1.0
    %v65 = vmul.f32 %v61, %v61
    %v66 = vmul.f32 %v62, %v62
    %v67 = vmul.f32 %v63, %v63
    %v68 = vmul.f32 %v64, %v64
    %v69 = vmul.f32 %v65, 0.5
    %v70 = vmul.f32 %v66, 0.5
    %v71 = vmul.f32 %v67, 0.5
    %v72 = vmul.f32 %v68, 0.5
    %v73 = vsub.f32 %v57, %v61
    %v74 = vsub.f32 %v58, %v62
    %v75 = vsub.f32 %v59, %v63
    %v76 = vsub.f32 %v60, %v64
    %v77 = vadd.f32 %v69, %v73
    %v78 = vadd.f32 %v70, %v74
    %v79 = vadd.f32 %v71, %v75
    %v80 = vadd.f32 %v72, %v76
    %v81 = vld [vmem:[#allocation7] sm:$0xff]
    %v82 = vadd.f32 %v77, %v78
    %v83 = vadd.f32 %v82, %v79
    %v84 = vadd.f32 %v83, %v80
    %v85 = vadd.f32 %v81, %v84
    %86 = vst [vmem:[#allocation7] sm:$0xff] %v85
    // Predicated region
    $region22: #{tpu_custom_call.1} parent=1 // pred_check
      _
    $region23: #{tpu_custom_call.1} parent=1 // pred_check_branch
      %88 = sbr.rel (0) target = $region25
    $region24: #{tpu_custom_call.1} parent=1 // pred_region
      %s90 = ssub.s32 128, 128
      %91 = vsyncadd [#allocation4], %s90
      %s93 = sshll.u32 [#allocation7], 4
      %s94 = int_to_ptr.vmem [resolvable:$true] %s93
      %96 = dma.vmem_to_hbm [thread:$0]  %s94, 128, %s2, [#allocation4]
    $region25: #{tpu_custom_call.1} parent=1 // pred_fallthru
      _
    // Predicated region
    $region26: #{tpu_custom_call.1} parent=1 // pred_check
      _
    $region27: #{tpu_custom_call.1} parent=1 // pred_check_branch
      %98 = sbr.rel (0) target = $region29
    $region28: #{tpu_custom_call.1} parent=1 // pred_region
      %99 = dma.done [#allocation4], 128
    $region29: #{tpu_custom_call.1} parent=1 // pred_fallthru
      _
    %100 = vsyncpa [#allocation3], 1
    %101 = vsyncpa [#allocation6], 1
    %102 = vsyncpa [#allocation4], 1

</llo_original>
